<compile_context>
chip_gen: v7x
topology: tpu7x:2x2x1
jax: 0.10.0
libtpu: 0.0.40
codegen_flags: <defaults>
</compile_context>

<pallas_src>
import functools
import math

import numpy as np
import jax
import jax.numpy as jnp
from jax.experimental import pallas as pl
from jax.experimental.pallas import tpu as pltpu


_LANE = 128
_SUBLANE = 8
_BLOCK_BUDGET_BYTES = 4 << 20    # ~4 MiB output blocks
_MAX_ROW_ELEMS = 128 * 1024      # cap per-row tile width (bounds PE-block VMEM, incl.
                                 # the 8x sublane padding of a (1, f_tile) flat PE block)
_VMEM_LIMIT_BYTES = 32 << 20     # plenty for 2x(out block) + 2x(pe block) on all gens


def _cdiv(a: int, b: int) -> int:
    return -(-a // b)


# ----------------------------------------------------------------------------
# Parameter construction (== PyTorch __init__), cached host- and device-side.
# ----------------------------------------------------------------------------
@functools.lru_cache(maxsize=None)
def _pe_table_host(d_model: int, max_seq_len: int) -> np.ndarray:
    """Sinusoidal table, shape (max_seq_len+1, d_model), row 0 = pad zeros."""
    pos = np.arange(max_seq_len, dtype=np.float64)[:, None]
    j = np.arange(d_model, dtype=np.float64)[None, :]
    angle = pos / np.power(10000.0, 2.0 * np.floor(j / 2.0) / d_model)
    pe = np.empty((max_seq_len, d_model), dtype=np.float64)
    pe[:, 0::2] = np.sin(angle[:, 0::2])
    pe[:, 1::2] = np.cos(angle[:, 1::2])
    table = np.concatenate([np.zeros((1, d_model), dtype=np.float64), pe], axis=0)
    return table.astype(np.float32)


@functools.lru_cache(maxsize=None)
def _pe_table_device(d_model: int, max_seq_len: int, flat: bool):
    """Device-resident PE rows for positions 0..max_seq_len-1 (i.e. table[1:]).

    Row t of this array is the encoding written at output position t.
    Cached across forward calls so the H2D upload + reshape happen once.
    """
    rows = _pe_table_host(d_model, max_seq_len)[1:]            # (max_seq_len, d_model)
    if flat:
        arr = rows.reshape(1, max_seq_len * d_model)            # lane-dense slab
    else:
        arr = rows.reshape(1, max_seq_len, d_model)
    return jnp.asarray(arr)


# ----------------------------------------------------------------------------
# Tiling choice.
# ----------------------------------------------------------------------------
def _choose_tiles(batch: int, total_row_elems: int, unit: int):
    """Pick (b_tile, row_tile) so output blocks are ~4 MiB and lane-dense.

    `unit` is the smallest legal per-row tile width in elements (multiple of
    128 lanes / whole sublane rows); `total_row_elems` is the exact per-row
    output width (max_len*d_model).
    """
    b_tile = batch if batch <= 64 else 64
    # If a single row-unit is already large (big odd d_model), shrink b_tile so
    # one output block stays <= ~8 MiB.
    b_tile = max(1, min(b_tile, (2 * _BLOCK_BUDGET_BYTES) // (4 * unit)))
    n_batch_tiles = _cdiv(batch, b_tile)

    target = _BLOCK_BUDGET_BYTES // (4 * b_tile)
    tile = max(unit, (min(target, _MAX_ROW_ELEMS) // unit) * unit)
    full = _cdiv(total_row_elems, unit) * unit
    tile = min(tile, full)
    # Guarantee >=2 blocks along a "parallel" grid axis when possible, so both
    # v7x TensorCores can share the HBM write bandwidth.
    if n_batch_tiles == 1 and tile >= total_row_elems and full >= 2 * unit:
        tile = _cdiv(_cdiv(total_row_elems, 2), unit) * unit
    n_row_tiles = _cdiv(total_row_elems, tile)
    return b_tile, n_batch_tiles, tile, n_row_tiles


# ----------------------------------------------------------------------------
# Kernels.  Grid = (seq_tiles, batch_tiles): seq outer, batch inner, so the PE
# block (indexed by seq tile only) stays resident across the inner loop.
# ----------------------------------------------------------------------------
def _pe_flat_kernel(limit_ref, pe_ref, out_ref):
    """Flattened lane-dense layout.

    limit_ref : VMEM int32[b_tile, 1]   per-row limit = len[b] * d_model
    pe_ref    : VMEM f32[1, f_tile]     flattened sinusoidal PE for this seq tile
    out_ref   : VMEM f32[b_tile, f_tile]
    """
    f_tile = out_ref.shape[1]
    base = pl.program_id(0) * f_tile
    # (1, f_tile) iota: VALU work / live int32 vregs stay O(f_tile), not O(b*f).
    flat = base + jax.lax.broadcasted_iota(jnp.int32, (1, f_tile), 1)
    mask = flat < limit_ref[...]                 # (b_tile, f_tile) via broadcast
    out_ref[...] = jnp.where(mask, pe_ref[...], 0.0).astype(out_ref.dtype)


def _pe_3d_kernel(len_ref, pe_ref, out_ref):
    """3-D layout for d_model % 128 == 0 (lane-dense stores, sublane-dense PE).

    len_ref : VMEM int32[b_tile, 1, 1]        per-row sequence length
    pe_ref  : VMEM f32[1, t_seq, d_model]
    out_ref : VMEM f32[b_tile, t_seq, d_model]
    """
    t_seq = out_ref.shape[1]
    base = pl.program_id(0) * t_seq
    pos = base + jax.lax.broadcasted_iota(jnp.int32, (1, t_seq, 1), 1)
    mask = pos < len_ref[...]                    # (b_tile, t_seq, 1) via broadcast
    out_ref[...] = jnp.where(mask, pe_ref[...], 0.0).astype(out_ref.dtype)


# ----------------------------------------------------------------------------
# Forward wrapper (mirrors PositionalEncoding.forward).
# ----------------------------------------------------------------------------
def positional_encoding_forward(input_len, d_model: int, max_seq_len: int):
    """input_len: numpy int array [B, 1] (or [B]).  Returns f32 [B, max_len, d_model]."""
    lengths = np.asarray(input_len).reshape(-1).astype(np.int32)   # [B]
    batch = int(lengths.shape[0])
    max_len = int(lengths.max())   # host-side, like torch.max on the numpy input
    if max_len > max_seq_len:
        raise ValueError(
            f"max(input_len)={max_len} exceeds max_seq_len={max_seq_len}; the "
            "positional table has no encoding for those positions.")

    compiler_params = pltpu.CompilerParams(
        dimension_semantics=("parallel", "parallel"),
        vmem_limit_bytes=_VMEM_LIMIT_BYTES,
    )

    if d_model % _LANE == 0:
        # ---- 3-D path: (b_tile, t_seq, d_model) blocks, per-position mask ----
        pe = _pe_table_device(d_model, max_seq_len, flat=False)  # (1, max_seq_len, d_model)
        unit = _SUBLANE * d_model
        total = max_len * d_model
        b_tile, n_batch_tiles, row_tile, n_seq_tiles = _choose_tiles(batch, total, unit)
        t_seq = row_tile // d_model
        # NOTE: when batch % b_tile != 0 the padded rows of the last lens block
        # hold unspecified values; harmless because those output rows are
        # clipped on writeback (do not turn this into an accumulating block).
        lens_dev = jnp.asarray(lengths.reshape(batch, 1, 1))
        out = pl.pallas_call(
            _pe_3d_kernel,
            out_shape=jax.ShapeDtypeStruct((batch, max_len, d_model), jnp.float32),
            grid_spec=pltpu.PrefetchScalarGridSpec(
                num_scalar_prefetch=0,
                grid=(n_seq_tiles, n_batch_tiles),
                in_specs=[
                    pl.BlockSpec((b_tile, 1, 1), lambda si, bi: (bi, 0, 0)),
                    pl.BlockSpec((1, t_seq, d_model), lambda si, bi: (0, si, 0)),
                ],
                out_specs=pl.BlockSpec((b_tile, t_seq, d_model),
                                       lambda si, bi: (bi, si, 0)),
            ),
            compiler_params=compiler_params,
        )(lens_dev, pe)
        return out

    # ---- Flattened path: (b_tile, t_seq*d_model) lane-dense blocks ----
    total = max_len * d_model
    if total >= 2 ** 31:
        raise ValueError("max_len * d_model overflows the int32 flat index; "
                         "use a d_model that is a multiple of 128.")
    pe = _pe_table_device(d_model, max_seq_len, flat=True)       # (1, max_seq_len*d_model)
    unit = (d_model * _LANE) // math.gcd(d_model, _LANE)         # lcm(d_model, 128)
    b_tile, n_batch_tiles, f_tile, n_seq_tiles = _choose_tiles(batch, total, unit)
    # Per-row flattened limit: flat index < len[b]*d_model  <=>  t < len[b].
    limits = jnp.asarray(
        (lengths.astype(np.int64) * d_model).astype(np.int32).reshape(batch, 1))
    out_flat = pl.pallas_call(
        _pe_flat_kernel,
        out_shape=jax.ShapeDtypeStruct((batch, total), jnp.float32),
        grid_spec=pltpu.PrefetchScalarGridSpec(
            num_scalar_prefetch=0,
            grid=(n_seq_tiles, n_batch_tiles),
            in_specs=[
                pl.BlockSpec((b_tile, 1), lambda si, bi: (bi, 0)),
                pl.BlockSpec((1, f_tile), lambda si, bi: (0, si)),
            ],
            out_specs=pl.BlockSpec((b_tile, f_tile), lambda si, bi: (bi, si)),
        ),
        compiler_params=compiler_params,
    )(limits, pe)
    # Contiguous row-major reshape -> no extra HBM pass.
    return out_flat.reshape(batch, max_len, d_model)


# ----------------------------------------------------------------------------
# Pure-numpy replica of the PyTorch forward, for correctness checking.
# ----------------------------------------------------------------------------
def _reference_numpy(input_len, d_model: int, max_seq_len: int) -> np.ndarray:
    lengths = np.asarray(input_len).reshape(-1).astype(np.int64)
    max_len = int(lengths.max())
    table = _pe_table_host(d_model, max_seq_len)                 # (max_seq_len+1, d_model)
    input_pos = np.array(
        [list(range(1, int(L) + 1)) + [0] * (max_len - int(L)) for L in lengths],
        dtype=np.int64)
    return table[input_pos]                                      # [B, max_len, d_model]


if __name__ == "__main__":
    key = jax.random.PRNGKey(0)
    k1, k2 = jax.random.split(key)

    # Case 1: small / non-128-multiple d_model -> flattened lane-dense path.
    d_model, max_seq_len, batch = 32, 16, 4
    lengths = np.array(
        jax.random.randint(k1, (batch, 1), 1, max_seq_len + 1, dtype=jnp.int32))
    lengths[-1, 0] = max_seq_len   # deterministic; pins max_len = max_seq_len
    out = jax.block_until_ready(positional_encoding_forward(lengths, d_model, max_seq_len))
    ref = _reference_numpy(lengths, d_model, max_seq_len)
    np.testing.assert_allclose(np.asarray(out), ref, rtol=0, atol=1e-6)

    # Case 2: d_model % 128 == 0 -> 3-D lane/sublane-dense path.
    d_model, max_seq_len, batch = 128, 24, 5
    lengths = np.array(
        jax.random.randint(k2, (batch, 1), 1, max_seq_len + 1, dtype=jnp.int32))
    lengths[-1, 0] = max_seq_len
    out = jax.block_until_ready(positional_encoding_forward(lengths, d_model, max_seq_len))
    ref = _reference_numpy(lengths, d_model, max_seq_len)
    np.testing.assert_allclose(np.asarray(out), ref, rtol=0, atol=1e-6)

    print("KERNEL_OK")
</pallas_src>

<mosaic_0001>
module attributes {stable_mosaic.version = 11 : i64} {
  func.func @_pe_flat_kernel(%arg0: i32, %arg1: i32, %arg2: memref<4x1xi32, #tpu.memory_space<vmem>>, %arg3: memref<1x256xf32, #tpu.memory_space<vmem>>, %arg4: memref<4x256xf32, #tpu.memory_space<vmem>>) attributes {dimension_semantics = [#tpu.dimension_semantics<parallel>, #tpu.dimension_semantics<parallel>], iteration_bounds = array<i64: 2, 1>, scalar_prefetch = 0 : i64, scratch_operands = 0 : i64, tpu.core_type = #tpu.core_type<tc>, window_params = [{transform_indices = @transform_0, window_bounds = array<i64: 4, 1>}, {transform_indices = @transform_1, window_bounds = array<i64: 1, 256>}, {transform_indices = @transform_2, window_bounds = array<i64: 4, 256>}]} {
    %c256_i32 = arith.constant 256 : i32
    %0 = arith.muli %arg0, %c256_i32 : i32
    %1 = tpu.iota {dimensions = array<i32: 1>} : vector<1x256xi32>
    %2 = vector.broadcast %0 : i32 to vector<1x256xi32>
    %3 = arith.addi %2, %1 : vector<1x256xi32>
    %c0 = arith.constant 0 : index
    %c0_0 = arith.constant 0 : index
    %4 = vector.load %arg2[%c0, %c0_0] : memref<4x1xi32, #tpu.memory_space<vmem>>, vector<4x1xi32>
    %5 = vector.broadcast %3 : vector<1x256xi32> to vector<4x256xi32>
    %6 = vector.broadcast %4 : vector<4x1xi32> to vector<4x256xi32>
    %7 = arith.cmpi slt, %5, %6 : vector<4x256xi32>
    %c0_1 = arith.constant 0 : index
    %c0_2 = arith.constant 0 : index
    %8 = vector.load %arg3[%c0_1, %c0_2] : memref<1x256xf32, #tpu.memory_space<vmem>>, vector<1x256xf32>
    %cst = arith.constant 0.000000e+00 : f32
    %9 = vector.shape_cast %8 : vector<1x256xf32> to vector<1x256xf32>
    %10 = vector.broadcast %9 : vector<1x256xf32> to vector<4x256xf32>
    %11 = vector.broadcast %cst : f32 to vector<4x256xf32>
    %12 = arith.select %7, %10, %11 : vector<4x256xi1>, vector<4x256xf32>
    %c0_3 = arith.constant 0 : index
    %c0_4 = arith.constant 0 : index
    %13 = vector.load %arg4[%c0_3, %c0_4] : memref<4x256xf32, #tpu.memory_space<vmem>>, vector<4x256xf32>
    tpu.vector_store %arg4[%c0_3, %c0_4], %12 {strides = array<i32>} : memref<4x256xf32, #tpu.memory_space<vmem>>, vector<4x256xf32>,
    return
  }
  func.func @transform_0(%arg0: i32, %arg1: i32) -> (i32, i32) {
    %c0_i32 = arith.constant 0 : i32
    %c0_i32_0 = arith.constant 0 : i32
    return %arg1, %c0_i32 : i32, i32
  }
  func.func @transform_1(%arg0: i32, %arg1: i32) -> (i32, i32) {
    %c0_i32 = arith.constant 0 : i32
    %c0_i32_0 = arith.constant 0 : i32
    return %c0_i32, %arg0 : i32, i32
  }
  func.func @transform_2(%arg0: i32, %arg1: i32) -> (i32, i32) {
    %c0_i32 = arith.constant 0 : i32
    return %arg1, %arg0 : i32, i32
  }
}

</mosaic_0001>

<llo_original>
// kernel: tpu_custom_call.1
$region0: #{tpu_custom_call.1}
  #allocation0 [shape = 'u32[]', space=smem, size = 0x4, offset = 0x4, fixed_abs, tag = 'smem constant byte address 0x4 - core index']
  #allocation1 [shape = 'u32[144,128]{1,0:T(1,128)}', space=vmem, size = 0x12000, scoped, tag = 'internal scratch']
  %s0 = inlined_call_operand.vmem [shape: s32[4,1], index: 0, kind: input, shape index: {}]
  %s1 = inlined_call_operand.vmem [shape: f32[1,512], index: 1, kind: input, shape index: {}]
  %s2 = inlined_call_operand.hbm [shape: f32[4,512], index: 2, kind: output, shape index: {}]
  %s3 = sld [smem:[#allocation0]]
  $region41: #{tpu_custom_call.1} parent=0
    _
  %s5 = ssub.s32 1, %s3
  %s6 = scalar_select 0, %s5, %s3
  $region1: #{tpu_custom_call.1} parent=0
    #allocation2 [shape = 'u8[8192]{0}', space=vmem, size = 0x2000, scoped, tag = 'output window, operand 0']
    #allocation3 [shape = 's32[2]{0}', space=sflag, size = 0x8, scoped, tag = 'scoped memory for tpu_custom_call.1']
    %7 = vsyncpa [#allocation3], 0
    %s8 = scalar_lea.sflag [#allocation3], 1
    %9 = vsyncpa %s8, 0
    loop: start=0, step=1, limit=4
    $region2: #{tpu_custom_call.1} parent=1 // loop_pre_header
      _
    $region3: #{tpu_custom_call.1} parent=1 // loop_header
      %s11 = sphi 0, %s15
      %p12 = scmp.ge.s32.totalorder %s11, 4
      %s18 = sphi 0, %s30
      %s19 = sphi 0, %s26
      %s20 = sphi 0, %s18
      %s21 = sphi 0, %s19
      %s22 = sphi 0, %s20
      %s23 = sphi 0, %s21
      %s33 = sphi 0, %s35
      %s36 = sphi 0, %s33
      %s37 = sphi 0, %s36
      %s53 = sphi 0, %s37
      %s59 = sphi 0, %s61
      %s62 = sphi 0, %s59
      %s63 = sphi 0, %s62
      %s79 = sphi 0, %s63
      %s87 = sphi 0, %s89
      %s90 = sphi 0, %s87
      %s91 = sphi 0, %s90
      %s107 = sphi 0, %s91
    $region4: #{tpu_custom_call.1} parent=1 // loop_header_branch
      %14 = sbr.rel (%p12) target = $region8
    $region5: #{tpu_custom_call.1} parent=1 // loop_body
      %s16 = ssub.s32 %s11, 1
      %s17 = ssub.s32 %s11, 2
      %s24 = sadd.s32 1, %s19
      %p25 = scmp.ge.s32.totalorder %s24, 1
      %s26 = scalar_select %p25, 0, %s24
      %s27 = sadd.s32 1, %s18
      %s28 = scalar_select %p25, %s27, %s18
      %p29 = scmp.ge.s32.totalorder %s28, 2
      %s30 = scalar_select %p29, 0, %s28
      %s31 = ssub.s32 %s19, %s26
      %p32 = scmp.eq.s32.totalorder %s31, 0
      %s34 = sadd.s32 %s33, 1
      %s35 = scalar_select %p32, %s33, %s34
      %p38 = pneg %p32
      %p39 = scmp.eq.s32.totalorder %s11, 1
      %p40 = por %p38, %p39
      %p41 = scmp.ne.s32.totalorder %s33, %s36
      %p42 = scmp.eq.s32.totalorder %s11, 0
      %p43 = por %p41, %p42
      %p44 = scmp.ne.s32.totalorder %s33, %s36
      %p45 = scmp.eq.s32.totalorder %s16, 1
      %p46 = por %p44, %p45
      %p47 = scmp.ne.s32.totalorder %s36, %s37
      %p48 = scmp.eq.s32.totalorder %s16, 0
      %p49 = por %p47, %p48
      %p50 = scmp.ne.s32.totalorder %s36, %s37
      %p51 = scmp.eq.s32.totalorder %s17, 1
      %p52 = por %p50, %p51
      %p54 = scmp.ne.s32.totalorder %s37, %s53
      %p55 = scmp.eq.s32.totalorder %s17, 0
      %p56 = por %p54, %p55
      %s57 = ssub.s32 %s18, %s30
      %p58 = scmp.eq.s32.totalorder %s57, 0
      %s60 = sadd.s32 %s59, 1
      %s61 = scalar_select %p58, %s59, %s60
      %p64 = pneg %p58
      %p65 = scmp.eq.s32.totalorder %s11, 1
      %p66 = por %p64, %p65
      %p67 = scmp.ne.s32.totalorder %s59, %s62
      %p68 = scmp.eq.s32.totalorder %s11, 0
      %p69 = por %p67, %p68
      %p70 = scmp.ne.s32.totalorder %s59, %s62
      %p71 = scmp.eq.s32.totalorder %s16, 1
      %p72 = por %p70, %p71
      %p73 = scmp.ne.s32.totalorder %s62, %s63
      %p74 = scmp.eq.s32.totalorder %s16, 0
      %p75 = por %p73, %p74
      %p76 = scmp.ne.s32.totalorder %s62, %s63
      %p77 = scmp.eq.s32.totalorder %s17, 1
      %p78 = por %p76, %p77
      %p80 = scmp.ne.s32.totalorder %s63, %s79
      %p81 = scmp.eq.s32.totalorder %s17, 0
      %p82 = por %p80, %p81
      %s83 = ssub.s32 %s19, %s26
      %s84 = ssub.s32 %s18, %s30
      %s85 = sor.u32 %s83, %s84
      %p86 = scmp.eq.s32.totalorder %s85, 0
      %s88 = sadd.s32 %s87, 1
      %s89 = scalar_select %p86, %s87, %s88
      %p92 = pneg %p86
      %p93 = scmp.eq.s32.totalorder %s11, 1
      %p94 = por %p92, %p93
      %p95 = scmp.ne.s32.totalorder %s87, %s90
      %p96 = scmp.eq.s32.totalorder %s11, 0
      %p97 = por %p95, %p96
      %p98 = scmp.ne.s32.totalorder %s87, %s90
      %p99 = scmp.eq.s32.totalorder %s16, 1
      %p100 = por %p98, %p99
      %p101 = scmp.ne.s32.totalorder %s90, %s91
      %p102 = scmp.eq.s32.totalorder %s16, 0
      %p103 = por %p101, %p102
      %p104 = scmp.ne.s32.totalorder %s90, %s91
      %p105 = scmp.eq.s32.totalorder %s17, 1
      %p106 = por %p104, %p105
      %p108 = scmp.ne.s32.totalorder %s91, %s107
      %p109 = scmp.eq.s32.totalorder %s17, 0
      %p110 = por %p108, %p109
      %p111 = scmp.le.s32.totalorder 1, %s11
      %p112 = scmp.lt.s32.totalorder %s11, 3
      %p113 = pnand %p111, %p112
      %p114 = pneg %p113
      // Predicated region
      $region9: #{tpu_custom_call.1} parent=5 // pred_check
        _
      $region10: #{tpu_custom_call.1} parent=5 // pred_check_branch
        %116 = sbr.rel (%p113) target = $region12
      $region11: #{tpu_custom_call.1} parent=5 // pred_region
        %s117 = ssub.s32 %s11, 1
        // Predicated region
        $region13: #{tpu_custom_call.1} parent=11 // pred_check
          %p118 = pneg %p49
        $region14: #{tpu_custom_call.1} parent=11 // pred_check_branch
          %120 = sbr.rel (%p118) target = $region16
        $region15: #{tpu_custom_call.1} parent=11 // pred_region
          %p121 = scmp.lt.s32.totalorder %s21, 0
          %s122 = scalar_select %p121, %s21, 0
          %s123 = smul.addr %s122, 4
          %s124 = scalar_lea.vmem %s0, %s123
        $region16: #{tpu_custom_call.1} parent=11 // pred_fallthru
          _
      $region12: #{tpu_custom_call.1} parent=5 // pred_fallthru
        _
      %p125 = scmp.lt.s32.totalorder %s11, 2
      // Predicated region
      $region17: #{tpu_custom_call.1} parent=5 // pred_check
        %p126 = pneg %p125
      $region18: #{tpu_custom_call.1} parent=5 // pred_check_branch
        %128 = sbr.rel (%p126) target = $region20
      $region19: #{tpu_custom_call.1} parent=5 // pred_region
        // Predicated region
        $region21: #{tpu_custom_call.1} parent=19 // pred_check
          %p129 = pneg %p69
        $region22: #{tpu_custom_call.1} parent=19 // pred_check_branch
          %131 = sbr.rel (%p129) target = $region24
        $region23: #{tpu_custom_call.1} parent=19 // pred_region
          %s132 = smul.u32 2, %s18
          %p133 = scmp.lt.s32.totalorder %s132, 3
          %s134 = scalar_select %p133, %s132, 3
          %s135 = scalar_lea.vmem %s1, %s134
          %s136 = smul.u32 2, %s18
        $region24: #{tpu_custom_call.1} parent=19 // pred_fallthru
          _
      $region20: #{tpu_custom_call.1} parent=5 // pred_fallthru
        _
      %p137 = scmp.le.s32.totalorder 1, %s11
      %p138 = scmp.lt.s32.totalorder %s11, 3
      %p139 = pnand %p137, %p138
      %p140 = pneg %p139
      // Predicated region
      $region25: #{tpu_custom_call.1} parent=5 // pred_check
        _
      $region26: #{tpu_custom_call.1} parent=5 // pred_check_branch
        %142 = sbr.rel (%p139) target = $region28
      $region27: #{tpu_custom_call.1} parent=5 // pred_region
        %s143 = ssub.s32 %s11, 1
        %p144 = scmp.lt.s32.totalorder %s21, 0
        %s145 = scalar_select %p144, %s21, 0
        %s146 = smul.addr %s145, 4
        %s147 = scalar_lea.vmem %s0, %s146
        %p148 = pneg %p49
        %p149 = pneg %p46
        %s150 = smul.u32 2, %s20
        %p151 = scmp.lt.s32.totalorder %s150, 3
        %s152 = scalar_select %p151, %s150, 3
        %s153 = scalar_lea.vmem %s1, %s152
        %p154 = pneg %p75
        %p155 = pneg %p72
        %p156 = pneg %p103
        %p157 = pneg %p100
        %s158 = sand.u32 %s90, 1
        %s159 = scalar_lea.sflag [#allocation3], %s158
        %s160 = sand.u32 %s90, 1
        %s161 = smul.addr %s160, 8
        %s162 = scalar_lea.vmem [#allocation2], %s161
        %p163 = scmp.lt.s32.totalorder %s21, 0
        %s164 = scalar_select %p163, %s21, 0
        %s165 = smul.addr %s164, 4
        %s166 = scalar_lea.vmem %s0, %s165
        %s167 = smul.u32 2, %s20
        %p168 = scmp.lt.s32.totalorder %s167, 3
        %s169 = scalar_select %p168, %s167, 3
        %s170 = scalar_lea.vmem %s1, %s169
        %s171 = smul.u32 2, %s20
        %s172 = smul.u32 2, %s20
        %s173 = smul.u32 %s20, 256
        %v174 = vlaneseq
        %v175 = vand.u32 %v174, 127
        %v176 = vadd.s32 %v175, 128
        %v177 = vstv %s173
        %v178 = vadd.s32 %v177, %v175
        %v179 = vadd.s32 %v177, %v176
        %v180 = vld [vmem:[%s166] sm:$0xf]
        %181 = vset.pattern.permute.xlu0 0
        %182 = vperm.xlu0 %181, %v180
        %v183 = vpop.permute.xlu0 %182
        %vm184 = vcmp.lt.s32.totalorder %v178, %v183
        %vm185 = vcmp.lt.s32.totalorder %v179, %v183
        %v186 = vld [vmem:[%s170] sm:$0x3]
        %v188 = vlaneseq
        %v189 = vshrl.u32 %v188, 7
        %v190 = vsub.s32 0, %v189
        %v191 = vrot.slane %v186, %v190
        %v192 = vlaneseq
        %v193 = vshrl.u32 %v192, 7
        %v194 = vsub.s32 1, %v193
        %v195 = vrot.slane %v186, %v194
        %v198 = vsel %vm184, %v191, 0.0
        %v199 = vsel %vm185, %v195, 0.0
        %v202 = vcombine.low %v198, %v199
        %204 = vst [vmem:[%s162] sm:$0xff] %v202
        %s205 = sand.u32 %s90, 1
        %s206 = scalar_lea.sflag [#allocation3], %s205
        %s207 = sand.u32 %s90, 1
        %s208 = smul.addr %s207, 8
        %s209 = scalar_lea.vmem [#allocation2], %s208
        // Predicated region
        $region29: #{tpu_custom_call.1} parent=27 // pred_check
          %p210 = pneg %p100
        $region30: #{tpu_custom_call.1} parent=27 // pred_check_branch
          %212 = sbr.rel (%p210) target = $region32
        $region31: #{tpu_custom_call.1} parent=27 // pred_region
          %s213 = smul.u32 2, %s20
          %s215 = ssub.s32 128, 128
          %216 = vsyncadd %s206, %s215
          %s217 = smul.addr %s21, 4
          %s218 = sadd.s32 %s213, %s217
          %s219 = smul.addr %s218, 64
          %s220 = scalar_lea.hbm %s2, %s219
          %s222 = sshll.u32 %s209, 4
          %s223 = int_to_ptr.vmem [resolvable:$true] %s222
          %225 = dma.vmem_to_hbm [thread:$0]  %s223, 128, %s220, %s206
        $region32: #{tpu_custom_call.1} parent=27 // pred_fallthru
          _
      $region28: #{tpu_custom_call.1} parent=5 // pred_fallthru
        _
      %p226 = scmp.le.s32.totalorder 2, %s11
      // Predicated region
      $region33: #{tpu_custom_call.1} parent=5 // pred_check
        %p227 = pneg %p226
      $region34: #{tpu_custom_call.1} parent=5 // pred_check_branch
        %229 = sbr.rel (%p227) target = $region36
      $region35: #{tpu_custom_call.1} parent=5 // pred_region
        %s230 = ssub.s32 %s11, 2
        // Predicated region
        $region37: #{tpu_custom_call.1} parent=35 // pred_check
          %p231 = pneg %p106
        $region38: #{tpu_custom_call.1} parent=35 // pred_check_branch
          %233 = sbr.rel (%p231) target = $region40
        $region39: #{tpu_custom_call.1} parent=35 // pred_region
          %s234 = sand.u32 %s91, 1
          %s235 = scalar_lea.sflag [#allocation3], %s234
          %s236 = sand.u32 %s91, 1
          %s237 = smul.addr %s236, 8
          %s238 = scalar_lea.vmem [#allocation2], %s237
          %239 = dma.done %s235, 128
        $region40: #{tpu_custom_call.1} parent=35 // pred_fallthru
          _
      $region36: #{tpu_custom_call.1} parent=5 // pred_fallthru
        _
    $region6: #{tpu_custom_call.1} parent=1 // loop_footer
      %s15 = sadd.s32 1, %s11
    $region7: #{tpu_custom_call.1} parent=1 // loop_footer_branch
      %10 = sbr.rel target = $region3
    $region8: #{tpu_custom_call.1} parent=1 // loop_exit
      _
    %240 = vsyncpa [#allocation3], 1
    %s241 = scalar_lea.sflag [#allocation3], 1
    %242 = vsyncpa %s241, 1

</llo_original>
